<compile_context>
chip_gen: v7x
topology: tpu7x:2x2x1
jax: 0.10.0
libtpu: 0.0.40
codegen_flags: <defaults>
</compile_context>

<pallas_src>
import jax
import jax.numpy as jnp
from jax.experimental import pallas as pl
from jax.experimental.pallas import tpu as pltpu

_EPS = 1e-8     # F.cosine_similarity eps
_MARGIN = 1.0   # TripletMarginWithDistanceLoss(margin=1)


def _triplet_cos_kernel(a_ref, p_ref, n_ref, out_ref):
    """One grid step handles a (Bb, C, T) slab of all three inputs."""
    a = a_ref[...]  # (Bb, C, T) f32
    p = p_ref[...]
    n = n_ref[...]

    # Reductions over the channel axis (dim=1), matching cosine_similarity(dim=1).
    dot_ap = jnp.sum(a * p, axis=1)   # (Bb, T)
    dot_an = jnp.sum(a * n, axis=1)
    sq_a = jnp.sum(a * a, axis=1)
    sq_p = jnp.sum(p * p, axis=1)
    sq_n = jnp.sum(n * n, axis=1)

    eps = jnp.float32(_EPS)
    norm_a = jnp.maximum(jnp.sqrt(sq_a), eps)
    norm_p = jnp.maximum(jnp.sqrt(sq_p), eps)
    norm_n = jnp.maximum(jnp.sqrt(sq_n), eps)

    cos_p = dot_ap / (norm_a * norm_p)
    cos_n = dot_an / (norm_a * norm_n)

    # Triplet margin loss with "distance" = cosine similarity, margin = 1.
    out_ref[...] = jnp.maximum(
        cos_p - cos_n + jnp.float32(_MARGIN), jnp.float32(0.0)
    )


def _pick_block_b(B, C, T, budget_bytes=4 * 1024 * 1024):
    """Pick the batch-block size Bb (and padded B) so double-buffered inputs fit."""
    per_b = 3 * C * T * 4 * 2  # 3 f32 inputs, double-buffered by the pipeline
    max_bb = max(1, budget_bytes // max(per_b, 1))
    if max_bb >= B:
        return B, B                      # whole problem in one grid step
    bb = max(8, (max_bb // 8) * 8)       # keep output block sublane-aligned
    b_pad = ((B + bb - 1) // bb) * bb
    return bb, b_pad


@jax.jit
def triple_loss(zis, zjs, zks):
    """JAX/Pallas equivalent of TripleLoss().forward(zis, zjs, zks).

    zis, zjs, zks: (B, C, T) arrays (anchor, positive, negative).
    """
    B, C, T = zis.shape
    a = zis.astype(jnp.float32)
    p = zjs.astype(jnp.float32)
    n = zks.astype(jnp.float32)

    bb, b_pad = _pick_block_b(B, C, T)
    if b_pad != B:
        # Zero padding along B; padded rows are sliced off before the mean.
        pad = ((0, b_pad - B), (0, 0), (0, 0))
        a = jnp.pad(a, pad)
        p = jnp.pad(p, pad)
        n = jnp.pad(n, pad)
    num_blocks = b_pad // bb

    per_elem = pl.pallas_call(
        _triplet_cos_kernel,
        out_shape=jax.ShapeDtypeStruct((b_pad, T), jnp.float32),
        grid=(num_blocks,),
        in_specs=[
            pl.BlockSpec((bb, C, T), lambda i: (i, 0, 0)),
            pl.BlockSpec((bb, C, T), lambda i: (i, 0, 0)),
            pl.BlockSpec((bb, C, T), lambda i: (i, 0, 0)),
        ],
        out_specs=pl.BlockSpec((bb, T), lambda i: (i, 0)),
        compiler_params=pltpu.CompilerParams(
            dimension_semantics=("parallel",)  # blocks are independent
        ),
    )(a, p, n)

    # Final mean over the valid (B, T) elements — one tiny reduction in XLA.
    return jnp.mean(per_elem[:B])


# ---------------------------------------------------------------------------
# Pure-JAX reference (direct translation of the PyTorch semantics).
# ---------------------------------------------------------------------------
def _ref_loss(zis, zjs, zks):
    def cos(x1, x2):
        dot = jnp.sum(x1 * x2, axis=1)
        n1 = jnp.maximum(jnp.sqrt(jnp.sum(x1 * x1, axis=1)), _EPS)
        n2 = jnp.maximum(jnp.sqrt(jnp.sum(x2 * x2, axis=1)), _EPS)
        return dot / (n1 * n2)

    d_p = cos(zis, zjs)
    d_n = cos(zis, zks)
    return jnp.mean(jnp.maximum(d_p - d_n + _MARGIN, 0.0))


if __name__ == "__main__":
    B, C, T = 8, 32, 16
    key = jax.random.PRNGKey(0)
    k1, k2, k3 = jax.random.split(key, 3)
    zis = jax.random.normal(k1, (B, C, T), dtype=jnp.float32)
    zjs = jax.random.normal(k2, (B, C, T), dtype=jnp.float32)
    zks = jax.random.normal(k3, (B, C, T), dtype=jnp.float32)

    out = jax.block_until_ready(triple_loss(zis, zjs, zks))

    ref = jax.block_until_ready(_ref_loss(zis, zjs, zks))
    assert jnp.allclose(out, ref, rtol=1e-4, atol=1e-5), (out, ref)

    print("KERNEL_OK")
</pallas_src>

<mosaic_0001>
module attributes {stable_mosaic.version = 11 : i64} {
  func.func @_triplet_cos_kernel(%arg0: i32, %arg1: memref<8x32x16xf32, #tpu.memory_space<vmem>>, %arg2: memref<8x32x16xf32, #tpu.memory_space<vmem>>, %arg3: memref<8x32x16xf32, #tpu.memory_space<vmem>>, %arg4: memref<8x16xf32, #tpu.memory_space<vmem>>) attributes {dimension_semantics = [#tpu.dimension_semantics<parallel>], iteration_bounds = array<i64: 1>, scalar_prefetch = 0 : i64, scratch_operands = 0 : i64, tpu.core_type = #tpu.core_type<tc>, window_params = [{transform_indices = @transform_0, window_bounds = array<i64: 8, 32, 16>}, {transform_indices = @transform_1, window_bounds = array<i64: 8, 32, 16>}, {transform_indices = @transform_2, window_bounds = array<i64: 8, 32, 16>}, {transform_indices = @transform_3, window_bounds = array<i64: 8, 16>}]} {
    %c0 = arith.constant 0 : index
    %c0_0 = arith.constant 0 : index
    %c0_1 = arith.constant 0 : index
    %0 = vector.load %arg1[%c0, %c0_0, %c0_1] : memref<8x32x16xf32, #tpu.memory_space<vmem>>, vector<8x32x16xf32>
    %c0_2 = arith.constant 0 : index
    %c0_3 = arith.constant 0 : index
    %c0_4 = arith.constant 0 : index
    %1 = vector.load %arg2[%c0_2, %c0_3, %c0_4] : memref<8x32x16xf32, #tpu.memory_space<vmem>>, vector<8x32x16xf32>
    %c0_5 = arith.constant 0 : index
    %c0_6 = arith.constant 0 : index
    %c0_7 = arith.constant 0 : index
    %2 = vector.load %arg3[%c0_5, %c0_6, %c0_7] : memref<8x32x16xf32, #tpu.memory_space<vmem>>, vector<8x32x16xf32>
    %3 = arith.mulf %0, %1 : vector<8x32x16xf32>
    %cst = arith.constant dense<0.000000e+00> : vector<8x16xf32>
    %4 = vector.multi_reduction <add>, %3, %cst [1] : vector<8x32x16xf32> to vector<8x16xf32>
    %5 = arith.mulf %0, %2 : vector<8x32x16xf32>
    %cst_8 = arith.constant dense<0.000000e+00> : vector<8x16xf32>
    %6 = vector.multi_reduction <add>, %5, %cst_8 [1] : vector<8x32x16xf32> to vector<8x16xf32>
    %7 = arith.mulf %0, %0 : vector<8x32x16xf32>
    %cst_9 = arith.constant dense<0.000000e+00> : vector<8x16xf32>
    %8 = vector.multi_reduction <add>, %7, %cst_9 [1] : vector<8x32x16xf32> to vector<8x16xf32>
    %9 = arith.mulf %1, %1 : vector<8x32x16xf32>
    %cst_10 = arith.constant dense<0.000000e+00> : vector<8x16xf32>
    %10 = vector.multi_reduction <add>, %9, %cst_10 [1] : vector<8x32x16xf32> to vector<8x16xf32>
    %11 = arith.mulf %2, %2 : vector<8x32x16xf32>
    %cst_11 = arith.constant dense<0.000000e+00> : vector<8x16xf32>
    %12 = vector.multi_reduction <add>, %11, %cst_11 [1] : vector<8x32x16xf32> to vector<8x16xf32>
    %13 = math.sqrt %8 : vector<8x16xf32>
    %cst_12 = arith.constant 9.99999993E-9 : f32
    %14 = vector.broadcast %cst_12 : f32 to vector<8x16xf32>
    %15 = arith.maximumf %13, %14 : vector<8x16xf32>
    %16 = math.sqrt %10 : vector<8x16xf32>
    %cst_13 = arith.constant 9.99999993E-9 : f32
    %17 = vector.broadcast %cst_13 : f32 to vector<8x16xf32>
    %18 = arith.maximumf %16, %17 : vector<8x16xf32>
    %19 = math.sqrt %12 : vector<8x16xf32>
    %cst_14 = arith.constant 9.99999993E-9 : f32
    %20 = vector.broadcast %cst_14 : f32 to vector<8x16xf32>
    %21 = arith.maximumf %19, %20 : vector<8x16xf32>
    %22 = arith.mulf %15, %18 : vector<8x16xf32>
    %23 = arith.divf %4, %22 : vector<8x16xf32>
    %24 = arith.mulf %15, %21 : vector<8x16xf32>
    %25 = arith.divf %6, %24 : vector<8x16xf32>
    %26 = arith.subf %23, %25 : vector<8x16xf32>
    %cst_15 = arith.constant 1.000000e+00 : f32
    %27 = vector.broadcast %cst_15 : f32 to vector<8x16xf32>
    %28 = arith.addf %26, %27 : vector<8x16xf32>
    %cst_16 = arith.constant 0.000000e+00 : f32
    %29 = vector.broadcast %cst_16 : f32 to vector<8x16xf32>
    %30 = arith.maximumf %28, %29 : vector<8x16xf32>
    %c0_17 = arith.constant 0 : index
    %c0_18 = arith.constant 0 : index
    %31 = vector.load %arg4[%c0_17, %c0_18] : memref<8x16xf32, #tpu.memory_space<vmem>>, vector<8x16xf32>
    tpu.vector_store %arg4[%c0_17, %c0_18], %30 {strides = array<i32>} : memref<8x16xf32, #tpu.memory_space<vmem>>, vector<8x16xf32>,
    return
  }
  func.func @transform_0(%arg0: i32) -> (i32, i32, i32) {
    %c0_i32 = arith.constant 0 : i32
    %c0_i32_0 = arith.constant 0 : i32
    %c0_i32_1 = arith.constant 0 : i32
    return %arg0, %c0_i32, %c0_i32_0 : i32, i32, i32
  }
  func.func @transform_1(%arg0: i32) -> (i32, i32, i32) {
    %c0_i32 = arith.constant 0 : i32
    %c0_i32_0 = arith.constant 0 : i32
    %c0_i32_1 = arith.constant 0 : i32
    return %arg0, %c0_i32, %c0_i32_0 : i32, i32, i32
  }
  func.func @transform_2(%arg0: i32) -> (i32, i32, i32) {
    %c0_i32 = arith.constant 0 : i32
    %c0_i32_0 = arith.constant 0 : i32
    %c0_i32_1 = arith.constant 0 : i32
    return %arg0, %c0_i32, %c0_i32_0 : i32, i32, i32
  }
  func.func @transform_3(%arg0: i32) -> (i32, i32) {
    %c0_i32 = arith.constant 0 : i32
    %c0_i32_0 = arith.constant 0 : i32
    return %arg0, %c0_i32 : i32, i32
  }
}

</mosaic_0001>

<llo_original>
// kernel: triple_loss.1
$region0: #{triple_loss.1}
  #allocation0 [shape = 'u32[]', space=smem, size = 0x4, offset = 0x4, fixed_abs, tag = 'smem constant byte address 0x4 - core index']
  #allocation1 [shape = 'u32[144,128]{1,0:T(1,128)}', space=vmem, size = 0x12000, scoped, tag = 'internal scratch']
  %s0 = inlined_call_operand.vmem [shape: f32[8,32,16], index: 0, kind: input, shape index: {}]
  %s1 = inlined_call_operand.vmem [shape: f32[8,32,16], index: 1, kind: input, shape index: {}]
  %s2 = inlined_call_operand.vmem [shape: f32[8,32,16], index: 2, kind: input, shape index: {}]
  %s3 = inlined_call_operand.vmem [shape: f32[8,16], index: 3, kind: output, shape index: {}]
  %s4 = sld [smem:[#allocation0]]
  $region22: #{triple_loss.1} parent=0
    _
  %s6 = ssub.s32 1, %s4
  %s7 = scalar_select 0, %s6, %s4
  // Predicated region
  $region2: #{triple_loss.1} parent=0 // pred_check
    _
  $region3: #{triple_loss.1} parent=0 // pred_check_branch
    %9 = sbr.rel (0) target = $region5
  $region4: #{triple_loss.1} parent=0 // pred_region
    _
  $region5: #{triple_loss.1} parent=0 // pred_fallthru
    _
  // Predicated region
  $region6: #{triple_loss.1} parent=0 // pred_check
    _
  $region7: #{triple_loss.1} parent=0 // pred_check_branch
    %11 = sbr.rel (0) target = $region9
  $region8: #{triple_loss.1} parent=0 // pred_region
    _
  $region9: #{triple_loss.1} parent=0 // pred_fallthru
    _
  // Predicated region
  $region10: #{triple_loss.1} parent=0 // pred_check
    _
  $region11: #{triple_loss.1} parent=0 // pred_check_branch
    %13 = sbr.rel (0) target = $region13
  $region12: #{triple_loss.1} parent=0 // pred_region
    _
  $region13: #{triple_loss.1} parent=0 // pred_fallthru
    _
  %v14 = vld [vmem:[%s0] sm:$0xff]
  %v15 = vld [vmem:[%s0 + $0x8] sm:$0xff]
  %v16 = vld [vmem:[%s0 + $0x10] sm:$0xff]
  %v17 = vld [vmem:[%s0 + $0x18] sm:$0xff]
  %v18 = vld [vmem:[%s0 + $0x20] sm:$0xff]
  %v19 = vld [vmem:[%s0 + $0x28] sm:$0xff]
  %v20 = vld [vmem:[%s0 + $0x30] sm:$0xff]
  %v21 = vld [vmem:[%s0 + $0x38] sm:$0xff]
  %v22 = vld [vmem:[%s0 + $0x40] sm:$0xff]
  %v23 = vld [vmem:[%s0 + $0x48] sm:$0xff]
  %v24 = vld [vmem:[%s0 + $0x50] sm:$0xff]
  %v25 = vld [vmem:[%s0 + $0x58] sm:$0xff]
  %v26 = vld [vmem:[%s0 + $0x60] sm:$0xff]
  %v27 = vld [vmem:[%s0 + $0x68] sm:$0xff]
  %v28 = vld [vmem:[%s0 + $0x70] sm:$0xff]
  %v29 = vld [vmem:[%s0 + $0x78] sm:$0xff]
  %v30 = vld [vmem:[%s0 + $0x80] sm:$0xff]
  %v31 = vld [vmem:[%s0 + $0x88] sm:$0xff]
  %v32 = vld [vmem:[%s0 + $0x90] sm:$0xff]
  %v33 = vld [vmem:[%s0 + $0x98] sm:$0xff]
  %v34 = vld [vmem:[%s0 + $0xa0] sm:$0xff]
  %v35 = vld [vmem:[%s0 + $0xa8] sm:$0xff]
  %v36 = vld [vmem:[%s0 + $0xb0] sm:$0xff]
  %v37 = vld [vmem:[%s0 + $0xb8] sm:$0xff]
  %v38 = vld [vmem:[%s0 + $0xc0] sm:$0xff]
  %v39 = vld [vmem:[%s0 + $0xc8] sm:$0xff]
  %v40 = vld [vmem:[%s0 + $0xd0] sm:$0xff]
  %v41 = vld [vmem:[%s0 + $0xd8] sm:$0xff]
  %v42 = vld [vmem:[%s0 + $0xe0] sm:$0xff]
  %v43 = vld [vmem:[%s0 + $0xe8] sm:$0xff]
  %v44 = vld [vmem:[%s0 + $0xf0] sm:$0xff]
  %v45 = vld [vmem:[%s0 + $0xf8] sm:$0xff]
  %v46 = vld [vmem:[%s1] sm:$0xff]
  %v47 = vld [vmem:[%s1 + $0x8] sm:$0xff]
  %v48 = vld [vmem:[%s1 + $0x10] sm:$0xff]
  %v49 = vld [vmem:[%s1 + $0x18] sm:$0xff]
  %v50 = vld [vmem:[%s1 + $0x20] sm:$0xff]
  %v51 = vld [vmem:[%s1 + $0x28] sm:$0xff]
  %v52 = vld [vmem:[%s1 + $0x30] sm:$0xff]
  %v53 = vld [vmem:[%s1 + $0x38] sm:$0xff]
  %v54 = vld [vmem:[%s1 + $0x40] sm:$0xff]
  %v55 = vld [vmem:[%s1 + $0x48] sm:$0xff]
  %v56 = vld [vmem:[%s1 + $0x50] sm:$0xff]
  %v57 = vld [vmem:[%s1 + $0x58] sm:$0xff]
  %v58 = vld [vmem:[%s1 + $0x60] sm:$0xff]
  %v59 = vld [vmem:[%s1 + $0x68] sm:$0xff]
  %v60 = vld [vmem:[%s1 + $0x70] sm:$0xff]
  %v61 = vld [vmem:[%s1 + $0x78] sm:$0xff]
  %v62 = vld [vmem:[%s1 + $0x80] sm:$0xff]
  %v63 = vld [vmem:[%s1 + $0x88] sm:$0xff]
  %v64 = vld [vmem:[%s1 + $0x90] sm:$0xff]
  %v65 = vld [vmem:[%s1 + $0x98] sm:$0xff]
  %v66 = vld [vmem:[%s1 + $0xa0] sm:$0xff]
  %v67 = vld [vmem:[%s1 + $0xa8] sm:$0xff]
  %v68 = vld [vmem:[%s1 + $0xb0] sm:$0xff]
  %v69 = vld [vmem:[%s1 + $0xb8] sm:$0xff]
  %v70 = vld [vmem:[%s1 + $0xc0] sm:$0xff]
  %v71 = vld [vmem:[%s1 + $0xc8] sm:$0xff]
  %v72 = vld [vmem:[%s1 + $0xd0] sm:$0xff]
  %v73 = vld [vmem:[%s1 + $0xd8] sm:$0xff]
  %v74 = vld [vmem:[%s1 + $0xe0] sm:$0xff]
  %v75 = vld [vmem:[%s1 + $0xe8] sm:$0xff]
  %v76 = vld [vmem:[%s1 + $0xf0] sm:$0xff]
  %v77 = vld [vmem:[%s1 + $0xf8] sm:$0xff]
  %v78 = vld [vmem:[%s2] sm:$0xff]
  %v79 = vld [vmem:[%s2 + $0x8] sm:$0xff]
  %v80 = vld [vmem:[%s2 + $0x10] sm:$0xff]
  %v81 = vld [vmem:[%s2 + $0x18] sm:$0xff]
  %v82 = vld [vmem:[%s2 + $0x20] sm:$0xff]
  %v83 = vld [vmem:[%s2 + $0x28] sm:$0xff]
  %v84 = vld [vmem:[%s2 + $0x30] sm:$0xff]
  %v85 = vld [vmem:[%s2 + $0x38] sm:$0xff]
  %v86 = vld [vmem:[%s2 + $0x40] sm:$0xff]
  %v87 = vld [vmem:[%s2 + $0x48] sm:$0xff]
  %v88 = vld [vmem:[%s2 + $0x50] sm:$0xff]
  %v89 = vld [vmem:[%s2 + $0x58] sm:$0xff]
  %v90 = vld [vmem:[%s2 + $0x60] sm:$0xff]
  %v91 = vld [vmem:[%s2 + $0x68] sm:$0xff]
  %v92 = vld [vmem:[%s2 + $0x70] sm:$0xff]
  %v93 = vld [vmem:[%s2 + $0x78] sm:$0xff]
  %v94 = vld [vmem:[%s2 + $0x80] sm:$0xff]
  %v95 = vld [vmem:[%s2 + $0x88] sm:$0xff]
  %v96 = vld [vmem:[%s2 + $0x90] sm:$0xff]
  %v97 = vld [vmem:[%s2 + $0x98] sm:$0xff]
  %v98 = vld [vmem:[%s2 + $0xa0] sm:$0xff]
  %v99 = vld [vmem:[%s2 + $0xa8] sm:$0xff]
  %v100 = vld [vmem:[%s2 + $0xb0] sm:$0xff]
  %v101 = vld [vmem:[%s2 + $0xb8] sm:$0xff]
  %v102 = vld [vmem:[%s2 + $0xc0] sm:$0xff]
  %v103 = vld [vmem:[%s2 + $0xc8] sm:$0xff]
  %v104 = vld [vmem:[%s2 + $0xd0] sm:$0xff]
  %v105 = vld [vmem:[%s2 + $0xd8] sm:$0xff]
  %v106 = vld [vmem:[%s2 + $0xe0] sm:$0xff]
  %v107 = vld [vmem:[%s2 + $0xe8] sm:$0xff]
  %v108 = vld [vmem:[%s2 + $0xf0] sm:$0xff]
  %v109 = vld [vmem:[%s2 + $0xf8] sm:$0xff]
  %v110 = vmul.f32 %v14, %v46
  %v111 = vmul.f32 %v15, %v47
  %v112 = vmul.f32 %v16, %v48
  %v113 = vmul.f32 %v17, %v49
  %v114 = vmul.f32 %v18, %v50
  %v115 = vmul.f32 %v19, %v51
  %v116 = vmul.f32 %v20, %v52
  %v117 = vmul.f32 %v21, %v53
  %v118 = vmul.f32 %v22, %v54
  %v119 = vmul.f32 %v23, %v55
  %v120 = vmul.f32 %v24, %v56
  %v121 = vmul.f32 %v25, %v57
  %v122 = vmul.f32 %v26, %v58
  %v123 = vmul.f32 %v27, %v59
  %v124 = vmul.f32 %v28, %v60
  %v125 = vmul.f32 %v29, %v61
  %v126 = vmul.f32 %v30, %v62
  %v127 = vmul.f32 %v31, %v63
  %v128 = vmul.f32 %v32, %v64
  %v129 = vmul.f32 %v33, %v65
  %v130 = vmul.f32 %v34, %v66
  %v131 = vmul.f32 %v35, %v67
  %v132 = vmul.f32 %v36, %v68
  %v133 = vmul.f32 %v37, %v69
  %v134 = vmul.f32 %v38, %v70
  %v135 = vmul.f32 %v39, %v71
  %v136 = vmul.f32 %v40, %v72
  %v137 = vmul.f32 %v41, %v73
  %v138 = vmul.f32 %v42, %v74
  %v139 = vmul.f32 %v43, %v75
  %v140 = vmul.f32 %v44, %v76
  %v141 = vmul.f32 %v45, %v77
  %vm142 = vcmask 130048
  %v143 = vsel %vm142, %v110, 0.0
  %v144 = vsel %vm142, %v111, 0.0
  %v145 = vadd.f32 %v143, %v144
  %v146 = vsel %vm142, %v112, 0.0
  %v147 = vadd.f32 %v145, %v146
  %v148 = vsel %vm142, %v113, 0.0
  %v149 = vadd.f32 %v147, %v148
  %v150 = vrot.slane %v149, 4
  %v151 = vadd.f32 %v149, %v150
  %v152 = vrot.slane %v151, 2
  %v153 = vadd.f32 %v151, %v152
  %v154 = vrot.slane %v153, 1
  %v155 = vadd.f32 %v153, %v154
  %v156 = vsel %vm142, %v114, 0.0
  %v157 = vsel %vm142, %v115, 0.0
  %v158 = vadd.f32 %v156, %v157
  %v159 = vsel %vm142, %v116, 0.0
  %v160 = vadd.f32 %v158, %v159
  %v161 = vsel %vm142, %v117, 0.0
  %v162 = vadd.f32 %v160, %v161
  %v163 = vrot.slane %v162, 4
  %v164 = vadd.f32 %v162, %v163
  %v165 = vrot.slane %v164, 2
  %v166 = vadd.f32 %v164, %v165
  %v167 = vrot.slane %v166, 1
  %v168 = vadd.f32 %v166, %v167
  %v169 = vsel %vm142, %v118, 0.0
  %v170 = vsel %vm142, %v119, 0.0
  %v171 = vadd.f32 %v169, %v170
  %v172 = vsel %vm142, %v120, 0.0
  %v173 = vadd.f32 %v171, %v172
  %v174 = vsel %vm142, %v121, 0.0
  %v175 = vadd.f32 %v173, %v174
  %v176 = vrot.slane %v175, 4
  %v177 = vadd.f32 %v175, %v176
  %v178 = vrot.slane %v177, 2
  %v179 = vadd.f32 %v177, %v178
  %v180 = vrot.slane %v179, 1
  %v181 = vadd.f32 %v179, %v180
  %v182 = vsel %vm142, %v122, 0.0
  %v183 = vsel %vm142, %v123, 0.0
  %v184 = vadd.f32 %v182, %v183
  %v185 = vsel %vm142, %v124, 0.0
  %v186 = vadd.f32 %v184, %v185
  %v187 = vsel %vm142, %v125, 0.0
  %v188 = vadd.f32 %v186, %v187
  %v189 = vrot.slane %v188, 4
  %v190 = vadd.f32 %v188, %v189
  %v191 = vrot.slane %v190, 2
  %v192 = vadd.f32 %v190, %v191
  %v193 = vrot.slane %v192, 1
  %v194 = vadd.f32 %v192, %v193
  %v195 = vsel %vm142, %v126, 0.0
  %v196 = vsel %vm142, %v127, 0.0
  %v197 = vadd.f32 %v195, %v196
  %v198 = vsel %vm142, %v128, 0.0
  %v199 = vadd.f32 %v197, %v198
  %v200 = vsel %vm142, %v129, 0.0
  %v201 = vadd.f32 %v199, %v200
  %v202 = vrot.slane %v201, 4
  %v203 = vadd.f32 %v201, %v202
  %v204 = vrot.slane %v203, 2
  %v205 = vadd.f32 %v203, %v204
  %v206 = vrot.slane %v205, 1
  %v207 = vadd.f32 %v205, %v206
  %v208 = vsel %vm142, %v130, 0.0
  %v209 = vsel %vm142, %v131, 0.0
  %v210 = vadd.f32 %v208, %v209
  %v211 = vsel %vm142, %v132, 0.0
  %v212 = vadd.f32 %v210, %v211
  %v213 = vsel %vm142, %v133, 0.0
  %v214 = vadd.f32 %v212, %v213
  %v215 = vrot.slane %v214, 4
  %v216 = vadd.f32 %v214, %v215
  %v217 = vrot.slane %v216, 2
  %v218 = vadd.f32 %v216, %v217
  %v219 = vrot.slane %v218, 1
  %v220 = vadd.f32 %v218, %v219
  %v221 = vsel %vm142, %v134, 0.0
  %v222 = vsel %vm142, %v135, 0.0
  %v223 = vadd.f32 %v221, %v222
  %v224 = vsel %vm142, %v136, 0.0
  %v225 = vadd.f32 %v223, %v224
  %v226 = vsel %vm142, %v137, 0.0
  %v227 = vadd.f32 %v225, %v226
  %v228 = vrot.slane %v227, 4
  %v229 = vadd.f32 %v227, %v228
  %v230 = vrot.slane %v229, 2
  %v231 = vadd.f32 %v229, %v230
  %v232 = vrot.slane %v231, 1
  %v233 = vadd.f32 %v231, %v232
  %v234 = vsel %vm142, %v138, 0.0
  %v235 = vsel %vm142, %v139, 0.0
  %v236 = vadd.f32 %v234, %v235
  %v237 = vsel %vm142, %v140, 0.0
  %v238 = vadd.f32 %v236, %v237
  %v239 = vsel %vm142, %v141, 0.0
  %v240 = vadd.f32 %v238, %v239
  %v241 = vrot.slane %v240, 4
  %v242 = vadd.f32 %v240, %v241
  %v243 = vrot.slane %v242, 2
  %v244 = vadd.f32 %v242, %v243
  %v245 = vrot.slane %v244, 1
  %v246 = vadd.f32 %v244, %v245
  %v247 = vmul.f32 %v14, %v78
  %v248 = vmul.f32 %v15, %v79
  %v249 = vmul.f32 %v16, %v80
  %v250 = vmul.f32 %v17, %v81
  %v251 = vmul.f32 %v18, %v82
  %v252 = vmul.f32 %v19, %v83
  %v253 = vmul.f32 %v20, %v84
  %v254 = vmul.f32 %v21, %v85
  %v255 = vmul.f32 %v22, %v86
  %v256 = vmul.f32 %v23, %v87
  %v257 = vmul.f32 %v24, %v88
  %v258 = vmul.f32 %v25, %v89
  %v259 = vmul.f32 %v26, %v90
  %v260 = vmul.f32 %v27, %v91
  %v261 = vmul.f32 %v28, %v92
  %v262 = vmul.f32 %v29, %v93
  %v263 = vmul.f32 %v30, %v94
  %v264 = vmul.f32 %v31, %v95
  %v265 = vmul.f32 %v32, %v96
  %v266 = vmul.f32 %v33, %v97
  %v267 = vmul.f32 %v34, %v98
  %v268 = vmul.f32 %v35, %v99
  %v269 = vmul.f32 %v36, %v100
  %v270 = vmul.f32 %v37, %v101
  %v271 = vmul.f32 %v38, %v102
  %v272 = vmul.f32 %v39, %v103
  %v273 = vmul.f32 %v40, %v104
  %v274 = vmul.f32 %v41, %v105
  %v275 = vmul.f32 %v42, %v106
  %v276 = vmul.f32 %v43, %v107
  %v277 = vmul.f32 %v44, %v108
  %v278 = vmul.f32 %v45, %v109
  %v279 = vsel %vm142, %v247, 0.0
  %v280 = vsel %vm142, %v248, 0.0
  %v281 = vadd.f32 %v279, %v280
  %v282 = vsel %vm142, %v249, 0.0
  %v283 = vadd.f32 %v281, %v282
  %v284 = vsel %vm142, %v250, 0.0
  %v285 = vadd.f32 %v283, %v284
  %v286 = vrot.slane %v285, 4
  %v287 = vadd.f32 %v285, %v286
  %v288 = vrot.slane %v287, 2
  %v289 = vadd.f32 %v287, %v288
  %v290 = vrot.slane %v289, 1
  %v291 = vadd.f32 %v289, %v290
  %v292 = vsel %vm142, %v251, 0.0
  %v293 = vsel %vm142, %v252, 0.0
  %v294 = vadd.f32 %v292, %v293
  %v295 = vsel %vm142, %v253, 0.0
  %v296 = vadd.f32 %v294, %v295
  %v297 = vsel %vm142, %v254, 0.0
  %v298 = vadd.f32 %v296, %v297
  %v299 = vrot.slane %v298, 4
  %v300 = vadd.f32 %v298, %v299
  %v301 = vrot.slane %v300, 2
  %v302 = vadd.f32 %v300, %v301
  %v303 = vrot.slane %v302, 1
  %v304 = vadd.f32 %v302, %v303
  %v305 = vsel %vm142, %v255, 0.0
  %v306 = vsel %vm142, %v256, 0.0
  %v307 = vadd.f32 %v305, %v306
  %v308 = vsel %vm142, %v257, 0.0
  %v309 = vadd.f32 %v307, %v308
  %v310 = vsel %vm142, %v258, 0.0
  %v311 = vadd.f32 %v309, %v310
  %v312 = vrot.slane %v311, 4
  %v313 = vadd.f32 %v311, %v312
  %v314 = vrot.slane %v313, 2
  %v315 = vadd.f32 %v313, %v314
  %v316 = vrot.slane %v315, 1
  %v317 = vadd.f32 %v315, %v316
  %v318 = vsel %vm142, %v259, 0.0
  %v319 = vsel %vm142, %v260, 0.0
  %v320 = vadd.f32 %v318, %v319
  %v321 = vsel %vm142, %v261, 0.0
  %v322 = vadd.f32 %v320, %v321
  %v323 = vsel %vm142, %v262, 0.0
  %v324 = vadd.f32 %v322, %v323
  %v325 = vrot.slane %v324, 4
  %v326 = vadd.f32 %v324, %v325
  %v327 = vrot.slane %v326, 2
  %v328 = vadd.f32 %v326, %v327
  %v329 = vrot.slane %v328, 1
  %v330 = vadd.f32 %v328, %v329
  %v331 = vsel %vm142, %v263, 0.0
  %v332 = vsel %vm142, %v264, 0.0
  %v333 = vadd.f32 %v331, %v332
  %v334 = vsel %vm142, %v265, 0.0
  %v335 = vadd.f32 %v333, %v334
  %v336 = vsel %vm142, %v266, 0.0
  %v337 = vadd.f32 %v335, %v336
  %v338 = vrot.slane %v337, 4
  %v339 = vadd.f32 %v337, %v338
  %v340 = vrot.slane %v339, 2
  %v341 = vadd.f32 %v339, %v340
  %v342 = vrot.slane %v341, 1
  %v343 = vadd.f32 %v341, %v342
  %v344 = vsel %vm142, %v267, 0.0
  %v345 = vsel %vm142, %v268, 0.0
  %v346 = vadd.f32 %v344, %v345
  %v347 = vsel %vm142, %v269, 0.0
  %v348 = vadd.f32 %v346, %v347
  %v349 = vsel %vm142, %v270, 0.0
  %v350 = vadd.f32 %v348, %v349
  %v351 = vrot.slane %v350, 4
  %v352 = vadd.f32 %v350, %v351
  %v353 = vrot.slane %v352, 2
  %v354 = vadd.f32 %v352, %v353
  %v355 = vrot.slane %v354, 1
  %v356 = vadd.f32 %v354, %v355
  %v357 = vsel %vm142, %v271, 0.0
  %v358 = vsel %vm142, %v272, 0.0
  %v359 = vadd.f32 %v357, %v358
  %v360 = vsel %vm142, %v273, 0.0
  %v361 = vadd.f32 %v359, %v360
  %v362 = vsel %vm142, %v274, 0.0
  %v363 = vadd.f32 %v361, %v362
  %v364 = vrot.slane %v363, 4
  %v365 = vadd.f32 %v363, %v364
  %v366 = vrot.slane %v365, 2
  %v367 = vadd.f32 %v365, %v366
  %v368 = vrot.slane %v367, 1
  %v369 = vadd.f32 %v367, %v368
  %v370 = vsel %vm142, %v275, 0.0
  %v371 = vsel %vm142, %v276, 0.0
  %v372 = vadd.f32 %v370, %v371
  %v373 = vsel %vm142, %v277, 0.0
  %v374 = vadd.f32 %v372, %v373
  %v375 = vsel %vm142, %v278, 0.0
  %v376 = vadd.f32 %v374, %v375
  %v377 = vrot.slane %v376, 4
  %v378 = vadd.f32 %v376, %v377
  %v379 = vrot.slane %v378, 2
  %v380 = vadd.f32 %v378, %v379
  %v381 = vrot.slane %v380, 1
  %v382 = vadd.f32 %v380, %v381
  %v383 = vmul.f32 %v14, %v14
  %v384 = vmul.f32 %v15, %v15
  %v385 = vmul.f32 %v16, %v16
  %v386 = vmul.f32 %v17, %v17
  %v387 = vmul.f32 %v18, %v18
  %v388 = vmul.f32 %v19, %v19
  %v389 = vmul.f32 %v20, %v20
  %v390 = vmul.f32 %v21, %v21
  %v391 = vmul.f32 %v22, %v22
  %v392 = vmul.f32 %v23, %v23
  %v393 = vmul.f32 %v24, %v24
  %v394 = vmul.f32 %v25, %v25
  %v395 = vmul.f32 %v26, %v26
  %v396 = vmul.f32 %v27, %v27
  %v397 = vmul.f32 %v28, %v28
  %v398 = vmul.f32 %v29, %v29
  %v399 = vmul.f32 %v30, %v30
  %v400 = vmul.f32 %v31, %v31
  %v401 = vmul.f32 %v32, %v32
  %v402 = vmul.f32 %v33, %v33
  %v403 = vmul.f32 %v34, %v34
  %v404 = vmul.f32 %v35, %v35
  %v405 = vmul.f32 %v36, %v36
  %v406 = vmul.f32 %v37, %v37
  %v407 = vmul.f32 %v38, %v38
  %v408 = vmul.f32 %v39, %v39
  %v409 = vmul.f32 %v40, %v40
  %v410 = vmul.f32 %v41, %v41
  %v411 = vmul.f32 %v42, %v42
  %v412 = vmul.f32 %v43, %v43
  %v413 = vmul.f32 %v44, %v44
  %v414 = vmul.f32 %v45, %v45
  %v415 = vsel %vm142, %v383, 0.0
  %v416 = vsel %vm142, %v384, 0.0
  %v417 = vadd.f32 %v415, %v416
  %v418 = vsel %vm142, %v385, 0.0
  %v419 = vadd.f32 %v417, %v418
  %v420 = vsel %vm142, %v386, 0.0
  %v421 = vadd.f32 %v419, %v420
  %v422 = vrot.slane %v421, 4
  %v423 = vadd.f32 %v421, %v422
  %v424 = vrot.slane %v423, 2
  %v425 = vadd.f32 %v423, %v424
  %v426 = vrot.slane %v425, 1
  %v427 = vadd.f32 %v425, %v426
  %v428 = vsel %vm142, %v387, 0.0
  %v429 = vsel %vm142, %v388, 0.0
  %v430 = vadd.f32 %v428, %v429
  %v431 = vsel %vm142, %v389, 0.0
  %v432 = vadd.f32 %v430, %v431
  %v433 = vsel %vm142, %v390, 0.0
  %v434 = vadd.f32 %v432, %v433
  %v435 = vrot.slane %v434, 4
  %v436 = vadd.f32 %v434, %v435
  %v437 = vrot.slane %v436, 2
  %v438 = vadd.f32 %v436, %v437
  %v439 = vrot.slane %v438, 1
  %v440 = vadd.f32 %v438, %v439
  %v441 = vsel %vm142, %v391, 0.0
  %v442 = vsel %vm142, %v392, 0.0
  %v443 = vadd.f32 %v441, %v442
  %v444 = vsel %vm142, %v393, 0.0
  %v445 = vadd.f32 %v443, %v444
  %v446 = vsel %vm142, %v394, 0.0
  %v447 = vadd.f32 %v445, %v446
  %v448 = vrot.slane %v447, 4
  %v449 = vadd.f32 %v447, %v448
  %v450 = vrot.slane %v449, 2
  %v451 = vadd.f32 %v449, %v450
  %v452 = vrot.slane %v451, 1
  %v453 = vadd.f32 %v451, %v452
  %v454 = vsel %vm142, %v395, 0.0
  %v455 = vsel %vm142, %v396, 0.0
  %v456 = vadd.f32 %v454, %v455
  %v457 = vsel %vm142, %v397, 0.0
  %v458 = vadd.f32 %v456, %v457
  %v459 = vsel %vm142, %v398, 0.0
  %v460 = vadd.f32 %v458, %v459
  %v461 = vrot.slane %v460, 4
  %v462 = vadd.f32 %v460, %v461
  %v463 = vrot.slane %v462, 2
  %v464 = vadd.f32 %v462, %v463
  %v465 = vrot.slane %v464, 1
  %v466 = vadd.f32 %v464, %v465
  %v467 = vsel %vm142, %v399, 0.0
  %v468 = vsel %vm142, %v400, 0.0
  %v469 = vadd.f32 %v467, %v468
  %v470 = vsel %vm142, %v401, 0.0
  %v471 = vadd.f32 %v469, %v470
  %v472 = vsel %vm142, %v402, 0.0
  %v473 = vadd.f32 %v471, %v472
  %v474 = vrot.slane %v473, 4
  %v475 = vadd.f32 %v473, %v474
  %v476 = vrot.slane %v475, 2
  %v477 = vadd.f32 %v475, %v476
  %v478 = vrot.slane %v477, 1
  %v479 = vadd.f32 %v477, %v478
  %v480 = vsel %vm142, %v403, 0.0
  %v481 = vsel %vm142, %v404, 0.0
  %v482 = vadd.f32 %v480, %v481
  %v483 = vsel %vm142, %v405, 0.0
  %v484 = vadd.f32 %v482, %v483
  %v485 = vsel %vm142, %v406, 0.0
  %v486 = vadd.f32 %v484, %v485
  %v487 = vrot.slane %v486, 4
  %v488 = vadd.f32 %v486, %v487
  %v489 = vrot.slane %v488, 2
  %v490 = vadd.f32 %v488, %v489
  %v491 = vrot.slane %v490, 1
  %v492 = vadd.f32 %v490, %v491
  %v493 = vsel %vm142, %v407, 0.0
  %v494 = vsel %vm142, %v408, 0.0
  %v495 = vadd.f32 %v493, %v494
  %v496 = vsel %vm142, %v409, 0.0
  %v497 = vadd.f32 %v495, %v496
  %v498 = vsel %vm142, %v410, 0.0
  %v499 = vadd.f32 %v497, %v498
  %v500 = vrot.slane %v499, 4
  %v501 = vadd.f32 %v499, %v500
  %v502 = vrot.slane %v501, 2
  %v503 = vadd.f32 %v501, %v502
  %v504 = vrot.slane %v503, 1
  %v505 = vadd.f32 %v503, %v504
  %v506 = vsel %vm142, %v411, 0.0
  %v507 = vsel %vm142, %v412, 0.0
  %v508 = vadd.f32 %v506, %v507
  %v509 = vsel %vm142, %v413, 0.0
  %v510 = vadd.f32 %v508, %v509
  %v511 = vsel %vm142, %v414, 0.0
  %v512 = vadd.f32 %v510, %v511
  %v513 = vrot.slane %v512, 4
  %v514 = vadd.f32 %v512, %v513
  %v515 = vrot.slane %v514, 2
  %v516 = vadd.f32 %v514, %v515
  %v517 = vrot.slane %v516, 1
  %v518 = vadd.f32 %v516, %v517
  %v519 = vmul.f32 %v46, %v46
  %v520 = vmul.f32 %v47, %v47
  %v521 = vmul.f32 %v48, %v48
  %v522 = vmul.f32 %v49, %v49
  %v523 = vmul.f32 %v50, %v50
  %v524 = vmul.f32 %v51, %v51
  %v525 = vmul.f32 %v52, %v52
  %v526 = vmul.f32 %v53, %v53
  %v527 = vmul.f32 %v54, %v54
  %v528 = vmul.f32 %v55, %v55
  %v529 = vmul.f32 %v56, %v56
  %v530 = vmul.f32 %v57, %v57
  %v531 = vmul.f32 %v58, %v58
  %v532 = vmul.f32 %v59, %v59
  %v533 = vmul.f32 %v60, %v60
  %v534 = vmul.f32 %v61, %v61
  %v535 = vmul.f32 %v62, %v62
  %v536 = vmul.f32 %v63, %v63
  %v537 = vmul.f32 %v64, %v64
  %v538 = vmul.f32 %v65, %v65
  %v539 = vmul.f32 %v66, %v66
  %v540 = vmul.f32 %v67, %v67
  %v541 = vmul.f32 %v68, %v68
  %v542 = vmul.f32 %v69, %v69
  %v543 = vmul.f32 %v70, %v70
  %v544 = vmul.f32 %v71, %v71
  %v545 = vmul.f32 %v72, %v72
  %v546 = vmul.f32 %v73, %v73
  %v547 = vmul.f32 %v74, %v74
  %v548 = vmul.f32 %v75, %v75
  %v549 = vmul.f32 %v76, %v76
  %v550 = vmul.f32 %v77, %v77
  %v551 = vsel %vm142, %v519, 0.0
  %v552 = vsel %vm142, %v520, 0.0
  %v553 = vadd.f32 %v551, %v552
  %v554 = vsel %vm142, %v521, 0.0
  %v555 = vadd.f32 %v553, %v554
  %v556 = vsel %vm142, %v522, 0.0
  %v557 = vadd.f32 %v555, %v556
  %v558 = vrot.slane %v557, 4
  %v559 = vadd.f32 %v557, %v558
  %v560 = vrot.slane %v559, 2
  %v561 = vadd.f32 %v559, %v560
  %v562 = vrot.slane %v561, 1
  %v563 = vadd.f32 %v561, %v562
  %v564 = vsel %vm142, %v523, 0.0
  %v565 = vsel %vm142, %v524, 0.0
  %v566 = vadd.f32 %v564, %v565
  %v567 = vsel %vm142, %v525, 0.0
  %v568 = vadd.f32 %v566, %v567
  %v569 = vsel %vm142, %v526, 0.0
  %v570 = vadd.f32 %v568, %v569
  %v571 = vrot.slane %v570, 4
  %v572 = vadd.f32 %v570, %v571
  %v573 = vrot.slane %v572, 2
  %v574 = vadd.f32 %v572, %v573
  %v575 = vrot.slane %v574, 1
  %v576 = vadd.f32 %v574, %v575
  %v577 = vsel %vm142, %v527, 0.0
  %v578 = vsel %vm142, %v528, 0.0
  %v579 = vadd.f32 %v577, %v578
  %v580 = vsel %vm142, %v529, 0.0
  %v581 = vadd.f32 %v579, %v580
  %v582 = vsel %vm142, %v530, 0.0
  %v583 = vadd.f32 %v581, %v582
  %v584 = vrot.slane %v583, 4
  %v585 = vadd.f32 %v583, %v584
  %v586 = vrot.slane %v585, 2
  %v587 = vadd.f32 %v585, %v586
  %v588 = vrot.slane %v587, 1
  %v589 = vadd.f32 %v587, %v588
  %v590 = vsel %vm142, %v531, 0.0
  %v591 = vsel %vm142, %v532, 0.0
  %v592 = vadd.f32 %v590, %v591
  %v593 = vsel %vm142, %v533, 0.0
  %v594 = vadd.f32 %v592, %v593
  %v595 = vsel %vm142, %v534, 0.0
  %v596 = vadd.f32 %v594, %v595
  %v597 = vrot.slane %v596, 4
  %v598 = vadd.f32 %v596, %v597
  %v599 = vrot.slane %v598, 2
  %v600 = vadd.f32 %v598, %v599
  %v601 = vrot.slane %v600, 1
  %v602 = vadd.f32 %v600, %v601
  %v603 = vsel %vm142, %v535, 0.0
  %v604 = vsel %vm142, %v536, 0.0
  %v605 = vadd.f32 %v603, %v604
  %v606 = vsel %vm142, %v537, 0.0
  %v607 = vadd.f32 %v605, %v606
  %v608 = vsel %vm142, %v538, 0.0
  %v609 = vadd.f32 %v607, %v608
  %v610 = vrot.slane %v609, 4
  %v611 = vadd.f32 %v609, %v610
  %v612 = vrot.slane %v611, 2
  %v613 = vadd.f32 %v611, %v612
  %v614 = vrot.slane %v613, 1
  %v615 = vadd.f32 %v613, %v614
  %v616 = vsel %vm142, %v539, 0.0
  %v617 = vsel %vm142, %v540, 0.0
  %v618 = vadd.f32 %v616, %v617
  %v619 = vsel %vm142, %v541, 0.0
  %v620 = vadd.f32 %v618, %v619
  %v621 = vsel %vm142, %v542, 0.0
  %v622 = vadd.f32 %v620, %v621
  %v623 = vrot.slane %v622, 4
  %v624 = vadd.f32 %v622, %v623
  %v625 = vrot.slane %v624, 2
  %v626 = vadd.f32 %v624, %v625
  %v627 = vrot.slane %v626, 1
  %v628 = vadd.f32 %v626, %v627
  %v629 = vsel %vm142, %v543, 0.0
  %v630 = vsel %vm142, %v544, 0.0
  %v631 = vadd.f32 %v629, %v630
  %v632 = vsel %vm142, %v545, 0.0
  %v633 = vadd.f32 %v631, %v632
  %v634 = vsel %vm142, %v546, 0.0
  %v635 = vadd.f32 %v633, %v634
  %v636 = vrot.slane %v635, 4
  %v637 = vadd.f32 %v635, %v636
  %v638 = vrot.slane %v637, 2
  %v639 = vadd.f32 %v637, %v638
  %v640 = vrot.slane %v639, 1
  %v641 = vadd.f32 %v639, %v640
  %v642 = vsel %vm142, %v547, 0.0
  %v643 = vsel %vm142, %v548, 0.0
  %v644 = vadd.f32 %v642, %v643
  %v645 = vsel %vm142, %v549, 0.0
  %v646 = vadd.f32 %v644, %v645
  %v647 = vsel %vm142, %v550, 0.0
  %v648 = vadd.f32 %v646, %v647
  %v649 = vrot.slane %v648, 4
  %v650 = vadd.f32 %v648, %v649
  %v651 = vrot.slane %v650, 2
  %v652 = vadd.f32 %v650, %v651
  %v653 = vrot.slane %v652, 1
  %v654 = vadd.f32 %v652, %v653
  %v655 = vmul.f32 %v78, %v78
  %v656 = vmul.f32 %v79, %v79
  %v657 = vmul.f32 %v80, %v80
  %v658 = vmul.f32 %v81, %v81
  %v659 = vmul.f32 %v82, %v82
  %v660 = vmul.f32 %v83, %v83
  %v661 = vmul.f32 %v84, %v84
  %v662 = vmul.f32 %v85, %v85
  %v663 = vmul.f32 %v86, %v86
  %v664 = vmul.f32 %v87, %v87
  %v665 = vmul.f32 %v88, %v88
  %v666 = vmul.f32 %v89, %v89
  %v667 = vmul.f32 %v90, %v90
  %v668 = vmul.f32 %v91, %v91
  %v669 = vmul.f32 %v92, %v92
  %v670 = vmul.f32 %v93, %v93
  %v671 = vmul.f32 %v94, %v94
  %v672 = vmul.f32 %v95, %v95
  %v673 = vmul.f32 %v96, %v96
  %v674 = vmul.f32 %v97, %v97
  %v675 = vmul.f32 %v98, %v98
  %v676 = vmul.f32 %v99, %v99
  %v677 = vmul.f32 %v100, %v100
  %v678 = vmul.f32 %v101, %v101
  %v679 = vmul.f32 %v102, %v102
  %v680 = vmul.f32 %v103, %v103
  %v681 = vmul.f32 %v104, %v104
  %v682 = vmul.f32 %v105, %v105
  %v683 = vmul.f32 %v106, %v106
  %v684 = vmul.f32 %v107, %v107
  %v685 = vmul.f32 %v108, %v108
  %v686 = vmul.f32 %v109, %v109
  %v687 = vsel %vm142, %v655, 0.0
  %v688 = vsel %vm142, %v656, 0.0
  %v689 = vadd.f32 %v687, %v688
  %v690 = vsel %vm142, %v657, 0.0
  %v691 = vadd.f32 %v689, %v690
  %v692 = vsel %vm142, %v658, 0.0
  %v693 = vadd.f32 %v691, %v692
  %v694 = vrot.slane %v693, 4
  %v695 = vadd.f32 %v693, %v694
  %v696 = vrot.slane %v695, 2
  %v697 = vadd.f32 %v695, %v696
  %v698 = vrot.slane %v697, 1
  %v699 = vadd.f32 %v697, %v698
  %v700 = vsel %vm142, %v659, 0.0
  %v701 = vsel %vm142, %v660, 0.0
  %v702 = vadd.f32 %v700, %v701
  %v703 = vsel %vm142, %v661, 0.0
  %v704 = vadd.f32 %v702, %v703
  %v705 = vsel %vm142, %v662, 0.0
  %v706 = vadd.f32 %v704, %v705
  %v707 = vrot.slane %v706, 4
  %v708 = vadd.f32 %v706, %v707
  %v709 = vrot.slane %v708, 2
  %v710 = vadd.f32 %v708, %v709
  %v711 = vrot.slane %v710, 1
  %v712 = vadd.f32 %v710, %v711
  %v713 = vsel %vm142, %v663, 0.0
  %v714 = vsel %vm142, %v664, 0.0
  %v715 = vadd.f32 %v713, %v714
  %v716 = vsel %vm142, %v665, 0.0
  %v717 = vadd.f32 %v715, %v716
  %v718 = vsel %vm142, %v666, 0.0
  %v719 = vadd.f32 %v717, %v718
  %v720 = vrot.slane %v719, 4
  %v721 = vadd.f32 %v719, %v720
  %v722 = vrot.slane %v721, 2
  %v723 = vadd.f32 %v721, %v722
  %v724 = vrot.slane %v723, 1
  %v725 = vadd.f32 %v723, %v724
  %v726 = vsel %vm142, %v667, 0.0
  %v727 = vsel %vm142, %v668, 0.0
  %v728 = vadd.f32 %v726, %v727
  %v729 = vsel %vm142, %v669, 0.0
  %v730 = vadd.f32 %v728, %v729
  %v731 = vsel %vm142, %v670, 0.0
  %v732 = vadd.f32 %v730, %v731
  %v733 = vrot.slane %v732, 4
  %v734 = vadd.f32 %v732, %v733
  %v735 = vrot.slane %v734, 2
  %v736 = vadd.f32 %v734, %v735
  %v737 = vrot.slane %v736, 1
  %v738 = vadd.f32 %v736, %v737
  %v739 = vsel %vm142, %v671, 0.0
  %v740 = vsel %vm142, %v672, 0.0
  %v741 = vadd.f32 %v739, %v740
  %v742 = vsel %vm142, %v673, 0.0
  %v743 = vadd.f32 %v741, %v742
  %v744 = vsel %vm142, %v674, 0.0
  %v745 = vadd.f32 %v743, %v744
  %v746 = vrot.slane %v745, 4
  %v747 = vadd.f32 %v745, %v746
  %v748 = vrot.slane %v747, 2
  %v749 = vadd.f32 %v747, %v748
  %v750 = vrot.slane %v749, 1
  %v751 = vadd.f32 %v749, %v750
  %v752 = vsel %vm142, %v675, 0.0
  %v753 = vsel %vm142, %v676, 0.0
  %v754 = vadd.f32 %v752, %v753
  %v755 = vsel %vm142, %v677, 0.0
  %v756 = vadd.f32 %v754, %v755
  %v757 = vsel %vm142, %v678, 0.0
  %v758 = vadd.f32 %v756, %v757
  %v759 = vrot.slane %v758, 4
  %v760 = vadd.f32 %v758, %v759
  %v761 = vrot.slane %v760, 2
  %v762 = vadd.f32 %v760, %v761
  %v763 = vrot.slane %v762, 1
  %v764 = vadd.f32 %v762, %v763
  %v765 = vsel %vm142, %v679, 0.0
  %v766 = vsel %vm142, %v680, 0.0
  %v767 = vadd.f32 %v765, %v766
  %v768 = vsel %vm142, %v681, 0.0
  %v769 = vadd.f32 %v767, %v768
  %v770 = vsel %vm142, %v682, 0.0
  %v771 = vadd.f32 %v769, %v770
  %v772 = vrot.slane %v771, 4
  %v773 = vadd.f32 %v771, %v772
  %v774 = vrot.slane %v773, 2
  %v775 = vadd.f32 %v773, %v774
  %v776 = vrot.slane %v775, 1
  %v777 = vadd.f32 %v775, %v776
  %v778 = vsel %vm142, %v683, 0.0
  %v779 = vsel %vm142, %v684, 0.0
  %v780 = vadd.f32 %v778, %v779
  %v781 = vsel %vm142, %v685, 0.0
  %v782 = vadd.f32 %v780, %v781
  %v783 = vsel %vm142, %v686, 0.0
  %v784 = vadd.f32 %v782, %v783
  %v785 = vrot.slane %v784, 4
  %v786 = vadd.f32 %v784, %v785
  %v787 = vrot.slane %v786, 2
  %v788 = vadd.f32 %v786, %v787
  %v789 = vrot.slane %v788, 1
  %v790 = vadd.f32 %v788, %v789
  %v791 = vrsqrt.pop %v427
  %v792 = vmul.f32 %v427, %v791
  %vm793 = vcmp.eq.f32.partialorder %v427, inf
  %v794 = vsel %vm793, %v427, %v792
  %vm795 = vcmp.eq.f32.partialorder %v427, 0.0
  %v796 = vand.u32 %v427, 2147483648
  %v797 = vsel %vm795, %v796, %v794
  %v798 = vrsqrt.pop %v440
  %v799 = vmul.f32 %v440, %v798
  %vm800 = vcmp.eq.f32.partialorder %v440, inf
  %v801 = vsel %vm800, %v440, %v799
  %vm802 = vcmp.eq.f32.partialorder %v440, 0.0
  %v803 = vand.u32 %v440, 2147483648
  %v804 = vsel %vm802, %v803, %v801
  %v805 = vrsqrt.pop %v453
  %v806 = vmul.f32 %v453, %v805
  %vm807 = vcmp.eq.f32.partialorder %v453, inf
  %v808 = vsel %vm807, %v453, %v806
  %vm809 = vcmp.eq.f32.partialorder %v453, 0.0
  %v810 = vand.u32 %v453, 2147483648
  %v811 = vsel %vm809, %v810, %v808
  %v812 = vrsqrt.pop %v466
  %v813 = vmul.f32 %v466, %v812
  %vm814 = vcmp.eq.f32.partialorder %v466, inf
  %v815 = vsel %vm814, %v466, %v813
  %vm816 = vcmp.eq.f32.partialorder %v466, 0.0
  %v817 = vand.u32 %v466, 2147483648
  %v818 = vsel %vm816, %v817, %v815
  %v819 = vrsqrt.pop %v479
  %v820 = vmul.f32 %v479, %v819
  %vm821 = vcmp.eq.f32.partialorder %v479, inf
  %v822 = vsel %vm821, %v479, %v820
  %vm823 = vcmp.eq.f32.partialorder %v479, 0.0
  %v824 = vand.u32 %v479, 2147483648
  %v825 = vsel %vm823, %v824, %v822
  %v826 = vrsqrt.pop %v492
  %v827 = vmul.f32 %v492, %v826
  %vm828 = vcmp.eq.f32.partialorder %v492, inf
  %v829 = vsel %vm828, %v492, %v827
  %vm830 = vcmp.eq.f32.partialorder %v492, 0.0
  %v831 = vand.u32 %v492, 2147483648
  %v832 = vsel %vm830, %v831, %v829
  %v833 = vrsqrt.pop %v505
  %v834 = vmul.f32 %v505, %v833
  %vm835 = vcmp.eq.f32.partialorder %v505, inf
  %v836 = vsel %vm835, %v505, %v834
  %vm837 = vcmp.eq.f32.partialorder %v505, 0.0
  %v838 = vand.u32 %v505, 2147483648
  %v839 = vsel %vm837, %v838, %v836
  %v840 = vrsqrt.pop %v518
  %v841 = vmul.f32 %v518, %v840
  %vm842 = vcmp.eq.f32.partialorder %v518, inf
  %v843 = vsel %vm842, %v518, %v841
  %vm844 = vcmp.eq.f32.partialorder %v518, 0.0
  %v845 = vand.u32 %v518, 2147483648
  %v846 = vsel %vm844, %v845, %v843
  %v847 = vmax.f32 %v797, 1e-08
  %v848 = vmax.f32 %v804, 1e-08
  %v849 = vmax.f32 %v811, 1e-08
  %v850 = vmax.f32 %v818, 1e-08
  %v851 = vmax.f32 %v825, 1e-08
  %v852 = vmax.f32 %v832, 1e-08
  %v853 = vmax.f32 %v839, 1e-08
  %v854 = vmax.f32 %v846, 1e-08
  %v855 = vrsqrt.pop %v563
  %v856 = vmul.f32 %v563, %v855
  %vm857 = vcmp.eq.f32.partialorder %v563, inf
  %v858 = vsel %vm857, %v563, %v856
  %vm859 = vcmp.eq.f32.partialorder %v563, 0.0
  %v860 = vand.u32 %v563, 2147483648
  %v861 = vsel %vm859, %v860, %v858
  %v862 = vrsqrt.pop %v576
  %v863 = vmul.f32 %v576, %v862
  %vm864 = vcmp.eq.f32.partialorder %v576, inf
  %v865 = vsel %vm864, %v576, %v863
  %vm866 = vcmp.eq.f32.partialorder %v576, 0.0
  %v867 = vand.u32 %v576, 2147483648
  %v868 = vsel %vm866, %v867, %v865
  %v869 = vrsqrt.pop %v589
  %v870 = vmul.f32 %v589, %v869
  %vm871 = vcmp.eq.f32.partialorder %v589, inf
  %v872 = vsel %vm871, %v589, %v870
  %vm873 = vcmp.eq.f32.partialorder %v589, 0.0
  %v874 = vand.u32 %v589, 2147483648
  %v875 = vsel %vm873, %v874, %v872
  %v876 = vrsqrt.pop %v602
  %v877 = vmul.f32 %v602, %v876
  %vm878 = vcmp.eq.f32.partialorder %v602, inf
  %v879 = vsel %vm878, %v602, %v877
  %vm880 = vcmp.eq.f32.partialorder %v602, 0.0
  %v881 = vand.u32 %v602, 2147483648
  %v882 = vsel %vm880, %v881, %v879
  %v883 = vrsqrt.pop %v615
  %v884 = vmul.f32 %v615, %v883
  %vm885 = vcmp.eq.f32.partialorder %v615, inf
  %v886 = vsel %vm885, %v615, %v884
  %vm887 = vcmp.eq.f32.partialorder %v615, 0.0
  %v888 = vand.u32 %v615, 2147483648
  %v889 = vsel %vm887, %v888, %v886
  %v890 = vrsqrt.pop %v628
  %v891 = vmul.f32 %v628, %v890
  %vm892 = vcmp.eq.f32.partialorder %v628, inf
  %v893 = vsel %vm892, %v628, %v891
  %vm894 = vcmp.eq.f32.partialorder %v628, 0.0
  %v895 = vand.u32 %v628, 2147483648
  %v896 = vsel %vm894, %v895, %v893
  %v897 = vrsqrt.pop %v641
  %v898 = vmul.f32 %v641, %v897
  %vm899 = vcmp.eq.f32.partialorder %v641, inf
  %v900 = vsel %vm899, %v641, %v898
  %vm901 = vcmp.eq.f32.partialorder %v641, 0.0
  %v902 = vand.u32 %v641, 2147483648
  %v903 = vsel %vm901, %v902, %v900
  %v904 = vrsqrt.pop %v654
  %v905 = vmul.f32 %v654, %v904
  %vm906 = vcmp.eq.f32.partialorder %v654, inf
  %v907 = vsel %vm906, %v654, %v905
  %vm908 = vcmp.eq.f32.partialorder %v654, 0.0
  %v909 = vand.u32 %v654, 2147483648
  %v910 = vsel %vm908, %v909, %v907
  %v911 = vmax.f32 %v861, 1e-08
  %v912 = vmax.f32 %v868, 1e-08
  %v913 = vmax.f32 %v875, 1e-08
  %v914 = vmax.f32 %v882, 1e-08
  %v915 = vmax.f32 %v889, 1e-08
  %v916 = vmax.f32 %v896, 1e-08
  %v917 = vmax.f32 %v903, 1e-08
  %v918 = vmax.f32 %v910, 1e-08
  %v919 = vrsqrt.pop %v699
  %v920 = vmul.f32 %v699, %v919
  %vm921 = vcmp.eq.f32.partialorder %v699, inf
  %v922 = vsel %vm921, %v699, %v920
  %vm923 = vcmp.eq.f32.partialorder %v699, 0.0
  %v924 = vand.u32 %v699, 2147483648
  %v925 = vsel %vm923, %v924, %v922
  %v926 = vrsqrt.pop %v712
  %v927 = vmul.f32 %v712, %v926
  %vm928 = vcmp.eq.f32.partialorder %v712, inf
  %v929 = vsel %vm928, %v712, %v927
  %vm930 = vcmp.eq.f32.partialorder %v712, 0.0
  %v931 = vand.u32 %v712, 2147483648
  %v932 = vsel %vm930, %v931, %v929
  %v933 = vrsqrt.pop %v725
  %v934 = vmul.f32 %v725, %v933
  %vm935 = vcmp.eq.f32.partialorder %v725, inf
  %v936 = vsel %vm935, %v725, %v934
  %vm937 = vcmp.eq.f32.partialorder %v725, 0.0
  %v938 = vand.u32 %v725, 2147483648
  %v939 = vsel %vm937, %v938, %v936
  %v940 = vrsqrt.pop %v738
  %v941 = vmul.f32 %v738, %v940
  %vm942 = vcmp.eq.f32.partialorder %v738, inf
  %v943 = vsel %vm942, %v738, %v941
  %vm944 = vcmp.eq.f32.partialorder %v738, 0.0
  %v945 = vand.u32 %v738, 2147483648
  %v946 = vsel %vm944, %v945, %v943
  %v947 = vrsqrt.pop %v751
  %v948 = vmul.f32 %v751, %v947
  %vm949 = vcmp.eq.f32.partialorder %v751, inf
  %v950 = vsel %vm949, %v751, %v948
  %vm951 = vcmp.eq.f32.partialorder %v751, 0.0
  %v952 = vand.u32 %v751, 2147483648
  %v953 = vsel %vm951, %v952, %v950
  %v954 = vrsqrt.pop %v764
  %v955 = vmul.f32 %v764, %v954
  %vm956 = vcmp.eq.f32.partialorder %v764, inf
  %v957 = vsel %vm956, %v764, %v955
  %vm958 = vcmp.eq.f32.partialorder %v764, 0.0
  %v959 = vand.u32 %v764, 2147483648
  %v960 = vsel %vm958, %v959, %v957
  %v961 = vrsqrt.pop %v777
  %v962 = vmul.f32 %v777, %v961
  %vm963 = vcmp.eq.f32.partialorder %v777, inf
  %v964 = vsel %vm963, %v777, %v962
  %vm965 = vcmp.eq.f32.partialorder %v777, 0.0
  %v966 = vand.u32 %v777, 2147483648
  %v967 = vsel %vm965, %v966, %v964
  %v968 = vrsqrt.pop %v790
  %v969 = vmul.f32 %v790, %v968
  %vm970 = vcmp.eq.f32.partialorder %v790, inf
  %v971 = vsel %vm970, %v790, %v969
  %vm972 = vcmp.eq.f32.partialorder %v790, 0.0
  %v973 = vand.u32 %v790, 2147483648
  %v974 = vsel %vm972, %v973, %v971
  %v975 = vmax.f32 %v925, 1e-08
  %v976 = vmax.f32 %v932, 1e-08
  %v977 = vmax.f32 %v939, 1e-08
  %v978 = vmax.f32 %v946, 1e-08
  %v979 = vmax.f32 %v953, 1e-08
  %v980 = vmax.f32 %v960, 1e-08
  %v981 = vmax.f32 %v967, 1e-08
  %v982 = vmax.f32 %v974, 1e-08
  %v983 = vmul.f32 %v847, %v911
  %v984 = vmul.f32 %v848, %v912
  %v985 = vmul.f32 %v849, %v913
  %v986 = vmul.f32 %v850, %v914
  %v987 = vmul.f32 %v851, %v915
  %v988 = vmul.f32 %v852, %v916
  %v989 = vmul.f32 %v853, %v917
  %v990 = vmul.f32 %v854, %v918
  %v991 = vrcp.pop %v983
  %v992 = vmul.f32 %v155, %v991
  %v993 = vrcp.pop %v984
  %v994 = vmul.f32 %v168, %v993
  %v995 = vrcp.pop %v985
  %v996 = vmul.f32 %v181, %v995
  %v997 = vrcp.pop %v986
  %v998 = vmul.f32 %v194, %v997
  %v999 = vrcp.pop %v987
  %v1000 = vmul.f32 %v207, %v999
  %v1001 = vrcp.pop %v988
  %v1002 = vmul.f32 %v220, %v1001
  %v1003 = vrcp.pop %v989
  %v1004 = vmul.f32 %v233, %v1003
  %v1005 = vrcp.pop %v990
  %v1006 = vmul.f32 %v246, %v1005
  %v1007 = vmul.f32 %v847, %v975
  %v1008 = vmul.f32 %v848, %v976
  %v1009 = vmul.f32 %v849, %v977
  %v1010 = vmul.f32 %v850, %v978
  %v1011 = vmul.f32 %v851, %v979
  %v1012 = vmul.f32 %v852, %v980
  %v1013 = vmul.f32 %v853, %v981
  %v1014 = vmul.f32 %v854, %v982
  %v1015 = vrcp.pop %v1007
  %v1016 = vmul.f32 %v291, %v1015
  %v1017 = vrcp.pop %v1008
  %v1018 = vmul.f32 %v304, %v1017
  %v1019 = vrcp.pop %v1009
  %v1020 = vmul.f32 %v317, %v1019
  %v1021 = vrcp.pop %v1010
  %v1022 = vmul.f32 %v330, %v1021
  %v1023 = vrcp.pop %v1011
  %v1024 = vmul.f32 %v343, %v1023
  %v1025 = vrcp.pop %v1012
  %v1026 = vmul.f32 %v356, %v1025
  %v1027 = vrcp.pop %v1013
  %v1028 = vmul.f32 %v369, %v1027
  %v1029 = vrcp.pop %v1014
  %v1030 = vmul.f32 %v382, %v1029
  %v1031 = vsub.f32 %v992, %v1016
  %v1032 = vsub.f32 %v994, %v1018
  %v1033 = vsub.f32 %v996, %v1020
  %v1034 = vsub.f32 %v998, %v1022
  %v1035 = vsub.f32 %v1000, %v1024
  %v1036 = vsub.f32 %v1002, %v1026
  %v1037 = vsub.f32 %v1004, %v1028
  %v1038 = vsub.f32 %v1006, %v1030
  %v1039 = vadd.f32 %v1031, 1.0
  %v1040 = vadd.f32 %v1032, 1.0
  %v1041 = vadd.f32 %v1033, 1.0
  %v1042 = vadd.f32 %v1034, 1.0
  %v1043 = vadd.f32 %v1035, 1.0
  %v1044 = vadd.f32 %v1036, 1.0
  %v1045 = vadd.f32 %v1037, 1.0
  %v1046 = vadd.f32 %v1038, 1.0
  %v1047 = vmax.f32 %v1039, 0.0
  %v1048 = vmax.f32 %v1040, 0.0
  %v1049 = vmax.f32 %v1041, 0.0
  %v1050 = vmax.f32 %v1042, 0.0
  %v1051 = vmax.f32 %v1043, 0.0
  %v1052 = vmax.f32 %v1044, 0.0
  %v1053 = vmax.f32 %v1045, 0.0
  %v1054 = vmax.f32 %v1046, 0.0
  %vm1063 = vcmask 1041409
  %v1064 = vsel %vm1063, %v1048, %v1047
  %vm1065 = vcmask 1042434
  %v1066 = vsel %vm1065, %v1049, %v1064
  %vm1067 = vcmask 1043459
  %v1068 = vsel %vm1067, %v1050, %v1066
  %vm1069 = vcmask 1044484
  %v1070 = vsel %vm1069, %v1051, %v1068
  %vm1071 = vcmask 1045509
  %v1072 = vsel %vm1071, %v1052, %v1070
  %vm1073 = vcmask 1046534
  %v1074 = vsel %vm1073, %v1053, %v1072
  %vm1075 = vcmask 1047559
  %v1076 = vsel %vm1075, %v1054, %v1074
  %1078 = vst.msk [vmem:[%s3] sm:$0xff] %vm142, %v1076
  // Predicated region
  $region14: #{triple_loss.1} parent=0 // pred_check
    _
  $region15: #{triple_loss.1} parent=0 // pred_check_branch
    %1080 = sbr.rel (0) target = $region17
  $region16: #{triple_loss.1} parent=0 // pred_region
    _
  $region17: #{triple_loss.1} parent=0 // pred_fallthru
    _
  // Predicated region
  $region18: #{triple_loss.1} parent=0 // pred_check
    _
  $region19: #{triple_loss.1} parent=0 // pred_check_branch
    %1082 = sbr.rel (0) target = $region21
  $region20: #{triple_loss.1} parent=0 // pred_region
    _
  $region21: #{triple_loss.1} parent=0 // pred_fallthru
    _

</llo_original>
